<compile_context>
chip_gen: v5e
topology: v5e:2x2
jax: 0.10.0
libtpu: 0.0.40
codegen_flags: <defaults>
</compile_context>

<pallas_src>
import jax
import jax.numpy as jnp
import numpy as np
from jax.experimental import pallas as pl
from jax.experimental.pallas import tpu as pltpu


def _round_up(x, m):
    return (x + m - 1) // m * m


def _icm_inverse_kernel(
    x_ref,                                   # (2, TB, obs_dim) bf16 (obs ; next_obs)
    ew1_ref, ew2_ref,                        # encoder weights, bf16, VMEM-resident
    iw1_ref, iw2_ref,                        # inverse-model weights, bf16
    bias_ref,                                # (4, BP) f32 packed biases
    out_ref,                                 # (TB, AP) lane-dense output (AP = 128*k)
):
    TB = x_ref.shape[1]
    obs_dim = x_ref.shape[2]
    H1P = ew1_ref.shape[1]
    EP = ew2_ref.shape[1]
    H2P = iw1_ref.shape[2]
    AP = iw2_ref.shape[1]

    biases = bias_ref[...]                   # load once; static lane slices below
    eb1 = biases[0:1, :H1P]
    eb2 = biases[1:2, :EP]
    ib1 = biases[2:3, :H2P]
    ib2 = biases[3:4, :AP]                   # padded action lanes hold -1e30

    # ---- fused encoder over [obs ; next_obs] -------------------------------
    # Leading-dim merge of the pre-stacked input is layout-free (no concat copy).
    x = x_ref[...].reshape(2 * TB, obs_dim)                       # bf16 already
    h = jnp.dot(x, ew1_ref[...], preferred_element_type=jnp.float32) + eb1
    h = jnp.maximum(h, 0.0).astype(jnp.bfloat16)
    e = jnp.dot(h, ew2_ref[...], preferred_element_type=jnp.float32) + eb2
    # split while still f32, cast each half afterwards (TB is a multiple of 32,
    # and this avoids splitting packed bf16 sublane pairs in any case)
    e_obs = e[:TB].astype(jnp.bfloat16)
    e_nobs = e[TB:].astype(jnp.bfloat16)

    # ---- inverse model: hstack(e_obs, e_nobs) @ W1 as a split matmul -------
    h2 = (jnp.dot(e_obs, iw1_ref[0], preferred_element_type=jnp.float32)
          + jnp.dot(e_nobs, iw1_ref[1], preferred_element_type=jnp.float32)
          + ib1)
    h2 = jnp.maximum(h2, 0.0).astype(jnp.bfloat16)
    logits = jnp.dot(h2, iw2_ref[...], preferred_element_type=jnp.float32) + ib2

    # ---- softmax over the (padded) action axis ------------------------------
    # padded lanes carry -1e30 logits -> exp underflows to exactly 0
    m = jnp.max(logits, axis=1, keepdims=True)
    p = jnp.exp(logits - m)
    denom = jnp.sum(p, axis=1, keepdims=True)
    # Exact divide: rows must sum to 1.  (pl.reciprocal(approx=True) is only
    # ~1e-3 accurate and broke the normalization check.)
    out_ref[...] = (p / denom).astype(out_ref.dtype)


def icm_inverse_forward(obs, next_obs, packed, action_dim, *,
                        block_rows=256, min_grid_steps=2,
                        out_dtype=jnp.float32):
    """Full InverseEnvironmentModel forward in one batch-tiled Pallas call."""
    B, obs_dim = obs.shape
    AP = packed["iw2"].shape[1]
    H1P = packed["ew1"].shape[1]
    EP = packed["ew2"].shape[1]
    H2P = packed["iw1"].shape[2]

    # Batch tile: multiple of 32 sublanes; capped by block_rows; small enough
    # that the grid has >= min_grid_steps steps so the "parallel" batch axis is
    # sharded across both TensorCores on v7x.
    TB = _round_up(pl.cdiv(B, max(int(min_grid_steps), 1)), 32)
    TB = min(TB, _round_up(int(block_rows), 32))
    pB = _round_up(B, TB)

    # Pre-stack + pad + cast to bf16 in the wrapper: one input DMA stream per
    # grid step, half the HBM->VMEM input bytes, no in-kernel concat/cast.
    x = jnp.stack([obs, next_obs], axis=0).astype(jnp.bfloat16)   # (2, B, obs_dim)
    if pB != B:
        x = jnp.pad(x, ((0, 0), (0, pB - B), (0, 0)))

    grid = (pB // TB,)

    # Cheap scheduler hint so XLA overlaps this small custom call.
    flops = 2 * pB * (2 * (obs_dim * H1P + H1P * EP) + 2 * EP * H2P + H2P * AP)
    bytes_accessed = int(
        x.size * x.dtype.itemsize
        + sum(int(packed[k].size) * packed[k].dtype.itemsize
              for k in ("ew1", "ew2", "iw1", "iw2", "biases"))
        + pB * AP * np.dtype(out_dtype).itemsize)
    cost = pl.CostEstimate(flops=int(flops),
                           transcendentals=int(pB * AP),
                           bytes_accessed=bytes_accessed)

    in_specs = [
        pl.BlockSpec((2, TB, obs_dim), lambda i: (0, i, 0)),      # stacked obs tile
        # constant index_maps -> weights/biases stay VMEM-resident, DMA'd once
        pl.BlockSpec(packed["ew1"].shape, lambda i: (0, 0)),
        pl.BlockSpec(packed["ew2"].shape, lambda i: (0, 0)),
        pl.BlockSpec(packed["iw1"].shape, lambda i: (0, 0, 0)),
        pl.BlockSpec(packed["iw2"].shape, lambda i: (0, 0)),
        pl.BlockSpec(packed["biases"].shape, lambda i: (0, 0)),
    ]
    out = pl.pallas_call(
        _icm_inverse_kernel,
        out_shape=jax.ShapeDtypeStruct((pB, AP), out_dtype),
        grid=grid,
        in_specs=in_specs,
        out_specs=pl.BlockSpec((TB, AP), lambda i: (i, 0)),
        compiler_params=pltpu.CompilerParams(
            dimension_semantics=("parallel",)),
        cost_estimate=cost,
    )(x, packed["ew1"], packed["ew2"], packed["iw1"], packed["iw2"],
      packed["biases"])
    return out[:B, :action_dim]


def make_params(key, obs_dim, encoded_dim, action_dim, enc_hidden, inv_hidden):
    """f32 master params (PyTorch nn.Linear init, stored (in, out))."""
    ks = jax.random.split(key, 8)

    def lin(kw, kb, fan_in, fan_out):
        bound = 1.0 / np.sqrt(fan_in)
        w = jax.random.uniform(kw, (fan_in, fan_out), jnp.float32, -bound, bound)
        b = jax.random.uniform(kb, (1, fan_out), jnp.float32, -bound, bound)
        return w, b

    ew1, eb1 = lin(ks[0], ks[1], obs_dim, enc_hidden)
    ew2, eb2 = lin(ks[2], ks[3], enc_hidden, encoded_dim)
    iw1, ib1 = lin(ks[4], ks[5], 2 * encoded_dim, inv_hidden)
    iw2, ib2 = lin(ks[6], ks[7], inv_hidden, action_dim)
    return dict(ew1=ew1, eb1=eb1, ew2=ew2, eb2=eb2,
                iw1=iw1, ib1=ib1, iw2=iw2, ib2=ib2)


def pack_params(p, lane_multiple=128):
    """Pad output dims to `lane_multiple` lanes, cast weights to bf16, pack biases.

    lane_multiple=128 is right when real widths are <=128; on v7x with real
    widths >128 use 256 to fill the 2x256^2 MXU.
    """
    obs_dim, H1 = p["ew1"].shape
    E = p["ew2"].shape[1]
    H2 = p["iw1"].shape[1]
    A = p["iw2"].shape[1]
    H1P, EP, H2P, AP = (_round_up(d, lane_multiple) for d in (H1, E, H2, A))
    BP = max(H1P, EP, H2P, AP)

    def pad_w(w, rows, cols):
        r, c = w.shape
        return jnp.pad(w, ((0, rows - r), (0, cols - c))).astype(jnp.bfloat16)

    ew1 = pad_w(p["ew1"], obs_dim, H1P)
    ew2 = pad_w(p["ew2"], H1P, EP)
    iw1a = pad_w(p["iw1"][:E], EP, H2P)
    iw1b = pad_w(p["iw1"][E:], EP, H2P)
    iw1 = jnp.stack([iw1a, iw1b], axis=0)            # (2, EP, H2P)
    iw2 = pad_w(p["iw2"], H2P, AP)

    def pad_b(b, width, fill):
        b = b.reshape(1, -1).astype(jnp.float32)
        b = jnp.pad(b, ((0, 0), (0, width - b.shape[1])), constant_values=fill)
        return jnp.pad(b, ((0, 0), (0, BP - width)))

    biases = jnp.concatenate([
        pad_b(p["eb1"], H1P, 0.0),
        pad_b(p["eb2"], EP, 0.0),
        pad_b(p["ib1"], H2P, 0.0),
        pad_b(p["ib2"], AP, -1e30),                  # kill padded logit lanes
    ], axis=0)                                       # (4, BP) f32

    return dict(ew1=ew1, ew2=ew2, iw1=iw1, iw2=iw2, biases=biases)


def _reference(obs, next_obs, p):
    def enc(x):
        h = jnp.maximum(x @ p["ew1"] + p["eb1"], 0.0)
        return h @ p["ew2"] + p["eb2"]
    z = jnp.concatenate([enc(obs), enc(next_obs)], axis=1)
    h = jnp.maximum(z @ p["iw1"] + p["ib1"], 0.0)
    logits = h @ p["iw2"] + p["ib2"]
    return jax.nn.softmax(logits, axis=1)


if __name__ == "__main__":
    B, obs_dim, encoded_dim, action_dim = 40, 32, 16, 8
    enc_hidden, inv_hidden = 32, 32

    key = jax.random.PRNGKey(0)
    k_obs, k_nobs, k_params = jax.random.split(key, 3)
    obs = jax.random.normal(k_obs, (B, obs_dim), jnp.float32)
    next_obs = jax.random.normal(k_nobs, (B, obs_dim), jnp.float32)
    params = make_params(k_params, obs_dim, encoded_dim, action_dim,
                         enc_hidden, inv_hidden)
    packed = pack_params(params)

    # min_grid_steps=2 -> TB=32, pB=64: exercises the batch grid + padding path.
    out = icm_inverse_forward(obs, next_obs, packed, action_dim,
                              block_rows=256, min_grid_steps=2,
                              out_dtype=jnp.float32)
    out = jax.block_until_ready(out)
    out_np = np.asarray(out, dtype=np.float32)

    ref = np.asarray(_reference(obs, next_obs, params), dtype=np.float32)
    assert out_np.shape == (B, action_dim)
    assert np.all(np.isfinite(out_np))
    # exact divide -> rows sum to 1 up to f32 rounding
    assert np.allclose(out_np.sum(axis=1), 1.0, atol=1e-3), out_np.sum(axis=1)
    # bf16 weights/activations vs f32 reference
    assert np.allclose(out_np, ref, atol=5e-2), float(np.abs(out_np - ref).max())

    print("KERNEL_OK")
</pallas_src>

<mosaic_0001>
module attributes {stable_mosaic.version = 11 : i64} {
  func.func @_icm_inverse_kernel(%arg0: i32, %arg1: memref<2x32x32xbf16, #tpu.memory_space<vmem>>, %arg2: memref<32x128xbf16, #tpu.memory_space<vmem>>, %arg3: memref<128x128xbf16, #tpu.memory_space<vmem>>, %arg4: memref<2x128x128xbf16, #tpu.memory_space<vmem>>, %arg5: memref<128x128xbf16, #tpu.memory_space<vmem>>, %arg6: memref<4x128xf32, #tpu.memory_space<vmem>>, %arg7: memref<32x128xf32, #tpu.memory_space<vmem>>) attributes {dimension_semantics = [#tpu.dimension_semantics<parallel>], iteration_bounds = array<i64: 2>, scalar_prefetch = 0 : i64, scratch_operands = 0 : i64, tpu.core_type = #tpu.core_type<tc>, window_params = [{transform_indices = @transform_0, window_bounds = array<i64: 2, 32, 32>}, {pipeline_mode = #tpu.pipeline_mode<synchronous>, transform_indices = @transform_1, window_bounds = array<i64: 32, 128>}, {pipeline_mode = #tpu.pipeline_mode<synchronous>, transform_indices = @transform_2, window_bounds = array<i64: 128, 128>}, {pipeline_mode = #tpu.pipeline_mode<synchronous>, transform_indices = @transform_3, window_bounds = array<i64: 2, 128, 128>}, {pipeline_mode = #tpu.pipeline_mode<synchronous>, transform_indices = @transform_4, window_bounds = array<i64: 128, 128>}, {pipeline_mode = #tpu.pipeline_mode<synchronous>, transform_indices = @transform_5, window_bounds = array<i64: 4, 128>}, {transform_indices = @transform_6, window_bounds = array<i64: 32, 128>}]} {
    %c0 = arith.constant 0 : index
    %c0_0 = arith.constant 0 : index
    %0 = vector.load %arg6[%c0, %c0_0] : memref<4x128xf32, #tpu.memory_space<vmem>>, vector<4x128xf32>
    %1 = vector.extract_strided_slice %0 {offsets = [0, 0], sizes = [1, 128], strides = [1, 1]} : vector<4x128xf32> to vector<1x128xf32>
    %2 = vector.extract_strided_slice %0 {offsets = [1, 0], sizes = [1, 128], strides = [1, 1]} : vector<4x128xf32> to vector<1x128xf32>
    %3 = vector.extract_strided_slice %0 {offsets = [2, 0], sizes = [1, 128], strides = [1, 1]} : vector<4x128xf32> to vector<1x128xf32>
    %4 = vector.extract_strided_slice %0 {offsets = [3, 0], sizes = [1, 128], strides = [1, 1]} : vector<4x128xf32> to vector<1x128xf32>
    %c0_1 = arith.constant 0 : index
    %c0_2 = arith.constant 0 : index
    %c0_3 = arith.constant 0 : index
    %5 = vector.load %arg1[%c0_1, %c0_2, %c0_3] : memref<2x32x32xbf16, #tpu.memory_space<vmem>>, vector<2x32x32xbf16>
    %6 = vector.shape_cast %5 : vector<2x32x32xbf16> to vector<64x32xbf16>
    %c0_4 = arith.constant 0 : index
    %c0_5 = arith.constant 0 : index
    %7 = vector.load %arg2[%c0_4, %c0_5] : memref<32x128xbf16, #tpu.memory_space<vmem>>, vector<32x128xbf16>
    %cst = arith.constant dense<0.000000e+00> : vector<64x128xf32>
    %8 = tpu.matmul %6, %7, %cst {dimension_numbers = #tpu.dot_dimension_numbers<[1], [0], [0], [1], [0, 0, 1, 1], [], []>} : vector<64x32xbf16>, vector<32x128xbf16>, vector<64x128xf32> -> vector<64x128xf32>
    %9 = vector.broadcast %1 : vector<1x128xf32> to vector<64x128xf32>
    %10 = arith.addf %8, %9 : vector<64x128xf32>
    %cst_6 = arith.constant 0.000000e+00 : f32
    %11 = vector.broadcast %cst_6 : f32 to vector<64x128xf32>
    %12 = arith.maximumf %10, %11 : vector<64x128xf32>
    %13 = arith.truncf %12 : vector<64x128xf32> to vector<64x128xbf16>
    %c0_7 = arith.constant 0 : index
    %c0_8 = arith.constant 0 : index
    %14 = vector.load %arg3[%c0_7, %c0_8] : memref<128x128xbf16, #tpu.memory_space<vmem>>, vector<128x128xbf16>
    %cst_9 = arith.constant dense<0.000000e+00> : vector<64x128xf32>
    %15 = tpu.matmul %13, %14, %cst_9 {dimension_numbers = #tpu.dot_dimension_numbers<[1], [0], [0], [1], [0, 0, 1, 1], [], []>} : vector<64x128xbf16>, vector<128x128xbf16>, vector<64x128xf32> -> vector<64x128xf32>
    %16 = vector.broadcast %2 : vector<1x128xf32> to vector<64x128xf32>
    %17 = arith.addf %15, %16 : vector<64x128xf32>
    %18 = vector.extract_strided_slice %17 {offsets = [0, 0], sizes = [32, 128], strides = [1, 1]} : vector<64x128xf32> to vector<32x128xf32>
    %19 = arith.truncf %18 : vector<32x128xf32> to vector<32x128xbf16>
    %20 = vector.extract_strided_slice %17 {offsets = [32, 0], sizes = [32, 128], strides = [1, 1]} : vector<64x128xf32> to vector<32x128xf32>
    %21 = arith.truncf %20 : vector<32x128xf32> to vector<32x128xbf16>
    %c0_10 = arith.constant 0 : index
    %c0_11 = arith.constant 0 : index
    %c0_12 = arith.constant 0 : index
    %22 = vector.load %arg4[%c0_10, %c0_11, %c0_12] : memref<2x128x128xbf16, #tpu.memory_space<vmem>>, vector<1x128x128xbf16>
    %23 = vector.shape_cast %22 : vector<1x128x128xbf16> to vector<128x128xbf16>
    %cst_13 = arith.constant dense<0.000000e+00> : vector<32x128xf32>
    %24 = tpu.matmul %19, %23, %cst_13 {dimension_numbers = #tpu.dot_dimension_numbers<[1], [0], [0], [1], [0, 0, 1, 1], [], []>} : vector<32x128xbf16>, vector<128x128xbf16>, vector<32x128xf32> -> vector<32x128xf32>
    %c1 = arith.constant 1 : index
    %c0_14 = arith.constant 0 : index
    %c0_15 = arith.constant 0 : index
    %25 = vector.load %arg4[%c1, %c0_14, %c0_15] : memref<2x128x128xbf16, #tpu.memory_space<vmem>>, vector<1x128x128xbf16>
    %26 = vector.shape_cast %25 : vector<1x128x128xbf16> to vector<128x128xbf16>
    %cst_16 = arith.constant dense<0.000000e+00> : vector<32x128xf32>
    %27 = tpu.matmul %21, %26, %cst_16 {dimension_numbers = #tpu.dot_dimension_numbers<[1], [0], [0], [1], [0, 0, 1, 1], [], []>} : vector<32x128xbf16>, vector<128x128xbf16>, vector<32x128xf32> -> vector<32x128xf32>
    %28 = arith.addf %24, %27 : vector<32x128xf32>
    %29 = vector.broadcast %3 : vector<1x128xf32> to vector<32x128xf32>
    %30 = arith.addf %28, %29 : vector<32x128xf32>
    %cst_17 = arith.constant 0.000000e+00 : f32
    %31 = vector.broadcast %cst_17 : f32 to vector<32x128xf32>
    %32 = arith.maximumf %30, %31 : vector<32x128xf32>
    %33 = arith.truncf %32 : vector<32x128xf32> to vector<32x128xbf16>
    %c0_18 = arith.constant 0 : index
    %c0_19 = arith.constant 0 : index
    %34 = vector.load %arg5[%c0_18, %c0_19] : memref<128x128xbf16, #tpu.memory_space<vmem>>, vector<128x128xbf16>
    %cst_20 = arith.constant dense<0.000000e+00> : vector<32x128xf32>
    %35 = tpu.matmul %33, %34, %cst_20 {dimension_numbers = #tpu.dot_dimension_numbers<[1], [0], [0], [1], [0, 0, 1, 1], [], []>} : vector<32x128xbf16>, vector<128x128xbf16>, vector<32x128xf32> -> vector<32x128xf32>
    %36 = vector.broadcast %4 : vector<1x128xf32> to vector<32x128xf32>
    %37 = arith.addf %35, %36 : vector<32x128xf32>
    %cst_21 = arith.constant dense<0xFF800000> : vector<32xf32>
    %38 = vector.multi_reduction <maximumf>, %37, %cst_21 [1] : vector<32x128xf32> to vector<32xf32>
    %39 = vector.shape_cast %38 : vector<32xf32> to vector<32x1xf32>
    %40 = vector.broadcast %39 : vector<32x1xf32> to vector<32x128xf32>
    %41 = arith.subf %37, %40 : vector<32x128xf32>
    %42 = math.exp %41 : vector<32x128xf32>
    %cst_22 = arith.constant dense<0.000000e+00> : vector<32xf32>
    %43 = vector.multi_reduction <add>, %42, %cst_22 [1] : vector<32x128xf32> to vector<32xf32>
    %44 = vector.shape_cast %43 : vector<32xf32> to vector<32x1xf32>
    %45 = vector.broadcast %44 : vector<32x1xf32> to vector<32x128xf32>
    %46 = arith.divf %42, %45 : vector<32x128xf32>
    %c0_23 = arith.constant 0 : index
    %c0_24 = arith.constant 0 : index
    %47 = vector.load %arg7[%c0_23, %c0_24] : memref<32x128xf32, #tpu.memory_space<vmem>>, vector<32x128xf32>
    tpu.vector_store %arg7[%c0_23, %c0_24], %46 {strides = array<i32>} : memref<32x128xf32, #tpu.memory_space<vmem>>, vector<32x128xf32>,
    return
  }
  func.func @transform_0(%arg0: i32) -> (i32, i32, i32) {
    %c0_i32 = arith.constant 0 : i32
    %c0_i32_0 = arith.constant 0 : i32
    %c0_i32_1 = arith.constant 0 : i32
    return %c0_i32, %arg0, %c0_i32_0 : i32, i32, i32
  }
  func.func @transform_1(%arg0: i32) -> (i32, i32) {
    %c0_i32 = arith.constant 0 : i32
    %c0_i32_0 = arith.constant 0 : i32
    %c0_i32_1 = arith.constant 0 : i32
    return %c0_i32, %c0_i32_0 : i32, i32
  }
  func.func @transform_2(%arg0: i32) -> (i32, i32) {
    %c0_i32 = arith.constant 0 : i32
    %c0_i32_0 = arith.constant 0 : i32
    %c0_i32_1 = arith.constant 0 : i32
    return %c0_i32, %c0_i32_0 : i32, i32
  }
  func.func @transform_3(%arg0: i32) -> (i32, i32, i32) {
    %c0_i32 = arith.constant 0 : i32
    %c0_i32_0 = arith.constant 0 : i32
    %c0_i32_1 = arith.constant 0 : i32
    %c0_i32_2 = arith.constant 0 : i32
    return %c0_i32, %c0_i32_0, %c0_i32_1 : i32, i32, i32
  }
  func.func @transform_4(%arg0: i32) -> (i32, i32) {
    %c0_i32 = arith.constant 0 : i32
    %c0_i32_0 = arith.constant 0 : i32
    %c0_i32_1 = arith.constant 0 : i32
    return %c0_i32, %c0_i32_0 : i32, i32
  }
  func.func @transform_5(%arg0: i32) -> (i32, i32) {
    %c0_i32 = arith.constant 0 : i32
    %c0_i32_0 = arith.constant 0 : i32
    %c0_i32_1 = arith.constant 0 : i32
    return %c0_i32, %c0_i32_0 : i32, i32
  }
  func.func @transform_6(%arg0: i32) -> (i32, i32) {
    %c0_i32 = arith.constant 0 : i32
    %c0_i32_0 = arith.constant 0 : i32
    return %arg0, %c0_i32 : i32, i32
  }
}

</mosaic_0001>

<llo_original>
// kernel: tpu_custom_call.1
$region0: #{tpu_custom_call.1}
  #allocation0 [shape = 'u32[]', space=smem, size = 0x4, offset = 0x4, fixed_abs, tag = 'smem constant byte address 0x4 - core index']
  #allocation1 [shape = 'u32[72,128]{1,0:T(1,128)}', space=vmem, size = 0x9000, scoped, tag = 'internal scratch']
  %s0 = inlined_call_operand.vmem [shape: bf16[2,64,32], index: 0, kind: input, shape index: {}]
  %s1 = inlined_call_operand.vmem [shape: bf16[32,128], index: 1, kind: input, shape index: {}]
  %s2 = inlined_call_operand.vmem [shape: bf16[128,128], index: 2, kind: input, shape index: {}]
  %s3 = inlined_call_operand.hbm [shape: bf16[2,128,128], index: 3, kind: input, shape index: {}]
  %s4 = inlined_call_operand.hbm [shape: bf16[128,128], index: 4, kind: input, shape index: {}]
  %s5 = inlined_call_operand.vmem [shape: f32[4,128], index: 5, kind: input, shape index: {}]
  %s6 = inlined_call_operand.hbm [shape: f32[64,128], index: 6, kind: output, shape index: {}]
  %s7 = sld [smem:[#allocation0]]
  $region106: #{tpu_custom_call.1} parent=0
    _
  %s9 = ssub.s32 1, %s7
  %s10 = scalar_select 0, %s9, %s7
  $region1: #{tpu_custom_call.1} parent=0
    #allocation2 [shape = 'u8[32768]{0}', space=vmem, size = 0x8000, scoped, tag = 'input window, operand 0']
    #allocation3 [shape = 'u8[65536]{0}', space=vmem, size = 0x10000, scoped, tag = 'input window, operand 3, single buffered']
    #allocation4 [shape = 's32[2]{0}', space=sflag, size = 0x8, scoped, tag = 'scoped memory for tpu_custom_call.1']
    #allocation5 [shape = 's32[2]{0}', space=sflag, size = 0x8, scoped, tag = 'scoped memory for tpu_custom_call.1']
    #allocation6 [shape = 'u8[32768]{0}', space=vmem, size = 0x8000, scoped, tag = 'input window, operand 4, single buffered']
    #allocation7 [shape = 's32[1]{0}', space=sflag, size = 0x4, scoped, tag = 'scoped memory for tpu_custom_call.1']
    #allocation8 [shape = 'u8[32768]{0}', space=vmem, size = 0x8000, scoped, tag = 'output window, operand 0']
    %11 = vsyncpa [#allocation4], 0
    %12 = vsyncpa [#allocation7], 0
    %13 = vsyncpa [#allocation5], 0
    %s14 = scalar_lea.sflag [#allocation5], 1
    %15 = vsyncpa %s14, 0
    loop: start=0, step=1, limit=4
    $region2: #{tpu_custom_call.1} parent=1 // loop_pre_header
      _
    $region3: #{tpu_custom_call.1} parent=1 // loop_header
      %s17 = sphi 0, %s21
      %p18 = scmp.ge.s32.totalorder %s17, 4
      %s27 = sphi 0, %s29
      %s30 = sphi 0, %s27
      %s31 = sphi 0, %s30
      %s47 = sphi 0, %s31
      %s51 = sphi 0, %s51
      %s53 = sphi 0, %s51
      %s54 = sphi 0, %s53
      %s68 = sphi 0, %s54
      %s72 = sphi 0, %s72
      %s74 = sphi 0, %s72
      %s75 = sphi 0, %s74
      %s89 = sphi 0, %s75
      %s93 = sphi 0, %s93
      %s95 = sphi 0, %s93
      %s96 = sphi 0, %s95
      %s110 = sphi 0, %s96
      %s114 = sphi 0, %s114
      %s116 = sphi 0, %s114
      %s117 = sphi 0, %s116
      %s131 = sphi 0, %s117
      %s135 = sphi 0, %s135
      %s137 = sphi 0, %s135
      %s138 = sphi 0, %s137
      %s152 = sphi 0, %s138
      %s158 = sphi 0, %s160
      %s161 = sphi 0, %s158
      %s162 = sphi 0, %s161
      %s178 = sphi 0, %s162
    $region4: #{tpu_custom_call.1} parent=1 // loop_header_branch
      %20 = sbr.rel (%p18) target = $region8
    $region5: #{tpu_custom_call.1} parent=1 // loop_body
      %s22 = ssub.s32 %s17, 1
      %s23 = ssub.s32 %s17, 2
      %s24 = sadd.s32 %s17, 1
      %s25 = ssub.s32 %s17, %s24
      %p26 = scmp.eq.s32.totalorder %s25, 0
      %s28 = sadd.s32 %s27, 1
      %s29 = scalar_select %p26, %s27, %s28
      %p32 = pneg %p26
      %p33 = scmp.eq.s32.totalorder %s17, 1
      %p34 = por %p32, %p33
      %p35 = scmp.ne.s32.totalorder %s27, %s30
      %p36 = scmp.eq.s32.totalorder %s17, 0
      %p37 = por %p35, %p36
      %p38 = scmp.ne.s32.totalorder %s27, %s30
      %p39 = scmp.eq.s32.totalorder %s22, 1
      %p40 = por %p38, %p39
      %p41 = scmp.ne.s32.totalorder %s30, %s31
      %p42 = scmp.eq.s32.totalorder %s22, 0
      %p43 = por %p41, %p42
      %p44 = scmp.ne.s32.totalorder %s30, %s31
      %p45 = scmp.eq.s32.totalorder %s23, 1
      %p46 = por %p44, %p45
      %p48 = scmp.ne.s32.totalorder %s31, %s47
      %p49 = scmp.eq.s32.totalorder %s23, 0
      %p50 = por %p48, %p49
      %s52 = sadd.s32 %s51, 1
      %p55 = scmp.eq.s32.totalorder %s17, 1
      %p56 = scmp.ne.s32.totalorder %s51, %s53
      %p57 = scmp.eq.s32.totalorder %s17, 0
      %p58 = por %p56, %p57
      %p59 = scmp.ne.s32.totalorder %s51, %s53
      %p60 = scmp.eq.s32.totalorder %s22, 1
      %p61 = por %p59, %p60
      %p62 = scmp.ne.s32.totalorder %s53, %s54
      %p63 = scmp.eq.s32.totalorder %s22, 0
      %p64 = por %p62, %p63
      %p65 = scmp.ne.s32.totalorder %s53, %s54
      %p66 = scmp.eq.s32.totalorder %s23, 1
      %p67 = por %p65, %p66
      %p69 = scmp.ne.s32.totalorder %s54, %s68
      %p70 = scmp.eq.s32.totalorder %s23, 0
      %p71 = por %p69, %p70
      %s73 = sadd.s32 %s72, 1
      %p76 = scmp.eq.s32.totalorder %s17, 1
      %p77 = scmp.ne.s32.totalorder %s72, %s74
      %p78 = scmp.eq.s32.totalorder %s17, 0
      %p79 = por %p77, %p78
      %p80 = scmp.ne.s32.totalorder %s72, %s74
      %p81 = scmp.eq.s32.totalorder %s22, 1
      %p82 = por %p80, %p81
      %p83 = scmp.ne.s32.totalorder %s74, %s75
      %p84 = scmp.eq.s32.totalorder %s22, 0
      %p85 = por %p83, %p84
      %p86 = scmp.ne.s32.totalorder %s74, %s75
      %p87 = scmp.eq.s32.totalorder %s23, 1
      %p88 = por %p86, %p87
      %p90 = scmp.ne.s32.totalorder %s75, %s89
      %p91 = scmp.eq.s32.totalorder %s23, 0
      %p92 = por %p90, %p91
      %s94 = sadd.s32 %s93, 1
      %p97 = scmp.eq.s32.totalorder %s17, 1
      %p98 = scmp.ne.s32.totalorder %s93, %s95
      %p99 = scmp.eq.s32.totalorder %s17, 0
      %p100 = por %p98, %p99
      %p101 = scmp.ne.s32.totalorder %s93, %s95
      %p102 = scmp.eq.s32.totalorder %s22, 1
      %p103 = por %p101, %p102
      %p104 = scmp.ne.s32.totalorder %s95, %s96
      %p105 = scmp.eq.s32.totalorder %s22, 0
      %p106 = por %p104, %p105
      %p107 = scmp.ne.s32.totalorder %s95, %s96
      %p108 = scmp.eq.s32.totalorder %s23, 1
      %p109 = por %p107, %p108
      %p111 = scmp.ne.s32.totalorder %s96, %s110
      %p112 = scmp.eq.s32.totalorder %s23, 0
      %p113 = por %p111, %p112
      %s115 = sadd.s32 %s114, 1
      %p118 = scmp.eq.s32.totalorder %s17, 1
      %p119 = scmp.ne.s32.totalorder %s114, %s116
      %p120 = scmp.eq.s32.totalorder %s17, 0
      %p121 = por %p119, %p120
      %p122 = scmp.ne.s32.totalorder %s114, %s116
      %p123 = scmp.eq.s32.totalorder %s22, 1
      %p124 = por %p122, %p123
      %p125 = scmp.ne.s32.totalorder %s116, %s117
      %p126 = scmp.eq.s32.totalorder %s22, 0
      %p127 = por %p125, %p126
      %p128 = scmp.ne.s32.totalorder %s116, %s117
      %p129 = scmp.eq.s32.totalorder %s23, 1
      %p130 = por %p128, %p129
      %p132 = scmp.ne.s32.totalorder %s117, %s131
      %p133 = scmp.eq.s32.totalorder %s23, 0
      %p134 = por %p132, %p133
      %s136 = sadd.s32 %s135, 1
      %p139 = scmp.eq.s32.totalorder %s17, 1
      %p140 = scmp.ne.s32.totalorder %s135, %s137
      %p141 = scmp.eq.s32.totalorder %s17, 0
      %p142 = por %p140, %p141
      %p143 = scmp.ne.s32.totalorder %s135, %s137
      %p144 = scmp.eq.s32.totalorder %s22, 1
      %p145 = por %p143, %p144
      %p146 = scmp.ne.s32.totalorder %s137, %s138
      %p147 = scmp.eq.s32.totalorder %s22, 0
      %p148 = por %p146, %p147
      %p149 = scmp.ne.s32.totalorder %s137, %s138
      %p150 = scmp.eq.s32.totalorder %s23, 1
      %p151 = por %p149, %p150
      %p153 = scmp.ne.s32.totalorder %s138, %s152
      %p154 = scmp.eq.s32.totalorder %s23, 0
      %p155 = por %p153, %p154
      %s156 = ssub.s32 %s17, %s24
      %p157 = scmp.eq.s32.totalorder %s156, 0
      %s159 = sadd.s32 %s158, 1
      %s160 = scalar_select %p157, %s158, %s159
      %p163 = pneg %p157
      %p164 = scmp.eq.s32.totalorder %s17, 1
      %p165 = por %p163, %p164
      %p166 = scmp.ne.s32.totalorder %s158, %s161
      %p167 = scmp.eq.s32.totalorder %s17, 0
      %p168 = por %p166, %p167
      %p169 = scmp.ne.s32.totalorder %s158, %s161
      %p170 = scmp.eq.s32.totalorder %s22, 1
      %p171 = por %p169, %p170
      %p172 = scmp.ne.s32.totalorder %s161, %s162
      %p173 = scmp.eq.s32.totalorder %s22, 0
      %p174 = por %p172, %p173
      %p175 = scmp.ne.s32.totalorder %s161, %s162
      %p176 = scmp.eq.s32.totalorder %s23, 1
      %p177 = por %p175, %p176
      %p179 = scmp.ne.s32.totalorder %s162, %s178
      %p180 = scmp.eq.s32.totalorder %s23, 0
      %p181 = por %p179, %p180
      %p182 = scmp.le.s32.totalorder 1, %s17
      %p183 = scmp.lt.s32.totalorder %s17, 3
      %p184 = pnand %p182, %p183
      %p185 = pneg %p184
      // Predicated region
      $region9: #{tpu_custom_call.1} parent=5 // pred_check
        _
      $region10: #{tpu_custom_call.1} parent=5 // pred_check_branch
        %187 = sbr.rel (%p184) target = $region12
      $region11: #{tpu_custom_call.1} parent=5 // pred_region
        %s188 = ssub.s32 %s17, 1
        // Predicated region
        $region13: #{tpu_custom_call.1} parent=11 // pred_check
          %p189 = pneg %p64
        $region14: #{tpu_custom_call.1} parent=11 // pred_check_branch
          %191 = sbr.rel (%p189) target = $region16
        $region15: #{tpu_custom_call.1} parent=11 // pred_region
          _
        $region16: #{tpu_custom_call.1} parent=11 // pred_fallthru
          _
        // Predicated region
        $region17: #{tpu_custom_call.1} parent=11 // pred_check
          %p192 = pneg %p85
        $region18: #{tpu_custom_call.1} parent=11 // pred_check_branch
          %194 = sbr.rel (%p192) target = $region20
        $region19: #{tpu_custom_call.1} parent=11 // pred_region
          _
        $region20: #{tpu_custom_call.1} parent=11 // pred_fallthru
          _
        // Predicated region
        $region21: #{tpu_custom_call.1} parent=11 // pred_check
          %p195 = pneg %p106
        $region22: #{tpu_custom_call.1} parent=11 // pred_check_branch
          %197 = sbr.rel (%p195) target = $region24
        $region23: #{tpu_custom_call.1} parent=11 // pred_region
          %199 = vsyncadd [#allocation4], 0
          %s200 = sshll.u32 %s3, 4
          %s201 = int_to_ptr.hbm [resolvable:$true] %s200
          %s202 = sshll.u32 [#allocation3], 4
          %s203 = int_to_ptr.vmem [resolvable:$true] %s202
          %208 = dma.hbm_to_vmem [thread:$0]  %s201, 2048, %s203, [#allocation4], 64, 64, 4
        $region24: #{tpu_custom_call.1} parent=11 // pred_fallthru
          _
        // Predicated region
        $region25: #{tpu_custom_call.1} parent=11 // pred_check
          %p209 = pneg %p127
        $region26: #{tpu_custom_call.1} parent=11 // pred_check_branch
          %211 = sbr.rel (%p209) target = $region28
        $region27: #{tpu_custom_call.1} parent=11 // pred_region
          %213 = vsyncadd [#allocation7], 0
          %s214 = sshll.u32 %s4, 4
          %s215 = int_to_ptr.hbm [resolvable:$true] %s214
          %s216 = sshll.u32 [#allocation6], 4
          %s217 = int_to_ptr.vmem [resolvable:$true] %s216
          %222 = dma.hbm_to_vmem [thread:$0]  %s215, 1024, %s217, [#allocation7], 64, 64, 4
        $region28: #{tpu_custom_call.1} parent=11 // pred_fallthru
          _
        // Predicated region
        $region29: #{tpu_custom_call.1} parent=11 // pred_check
          %p223 = pneg %p148
        $region30: #{tpu_custom_call.1} parent=11 // pred_check_branch
          %225 = sbr.rel (%p223) target = $region32
        $region31: #{tpu_custom_call.1} parent=11 // pred_region
          _
        $region32: #{tpu_custom_call.1} parent=11 // pred_fallthru
          _
      $region12: #{tpu_custom_call.1} parent=5 // pred_fallthru
        _
      %p226 = scmp.lt.s32.totalorder %s17, 2
      // Predicated region
      $region33: #{tpu_custom_call.1} parent=5 // pred_check
        %p227 = pneg %p226
      $region34: #{tpu_custom_call.1} parent=5 // pred_check_branch
        %229 = sbr.rel (%p227) target = $region36
      $region35: #{tpu_custom_call.1} parent=5 // pred_region
        // Predicated region
        $region37: #{tpu_custom_call.1} parent=35 // pred_check
          %p230 = pneg %p37
        $region38: #{tpu_custom_call.1} parent=35 // pred_check_branch
          %232 = sbr.rel (%p230) target = $region40
        $region39: #{tpu_custom_call.1} parent=35 // pred_region
          %s233 = sand.u32 %s27, 1
          %s234 = sand.u32 %s27, 1
          %s235 = smul.addr %s234, 32
          %s236 = scalar_lea.vmem [#allocation2], %s235
          %s237 = smul.u32 4, %s17
          %s238 = smul.addr %s237, 4
          %s239 = scalar_lea.vmem %s0, %s238
          // Predicated region
          $region41: #{tpu_custom_call.1} parent=39 // pred_check
            _
          $region42: #{tpu_custom_call.1} parent=39 // pred_check_branch
            %241 = sbr.rel (0) target = $region44
          $region43: #{tpu_custom_call.1} parent=39 // pred_region
            // Predicated region
            $region45: #{tpu_custom_call.1} parent=43 // pred_check
              _
            $region46: #{tpu_custom_call.1} parent=43 // pred_check_branch
              %243 = sbr.rel target = $region48
            $region47: #{tpu_custom_call.1} parent=43 // pred_region
              // Predicated region
              $region60: #{tpu_custom_call.1} parent=47 // pred_check
                _
              $region61: #{tpu_custom_call.1} parent=47 // pred_check_branch
                %273 = sbr.rel (0) target = $region63
              $region62: #{tpu_custom_call.1} parent=47 // pred_region
                loop: start=0, step=1, limit=1
                $region64: #{tpu_custom_call.1} parent=62 // loop_pre_header
                  _
                $region65: #{tpu_custom_call.1} parent=62 // loop_header
                  %s275 = sphi 0, %s279
                  %p276 = scmp.ge.s32.totalorder %s275, 1
                  %s280 = sphi %s239, %s239
                  %s281 = sphi %s236, %s236
                $region66: #{tpu_custom_call.1} parent=62 // loop_header_branch
                  %278 = sbr.rel (%p276) target = $region70
                $region67: #{tpu_custom_call.1} parent=62 // loop_body
                  _
                $region68: #{tpu_custom_call.1} parent=62 // loop_footer
                  %s279 = sadd.s32 1, %s275
                $region69: #{tpu_custom_call.1} parent=62 // loop_footer_branch
                  %274 = sbr.rel target = $region65
                $region70: #{tpu_custom_call.1} parent=62 // loop_exit
                  _
                %s283 = ssub.s32 16, 1
                loop: start=0, step=1, limit=1
                $region71: #{tpu_custom_call.1} parent=62 // loop_pre_header
                  _
                $region72: #{tpu_custom_call.1} parent=62 // loop_header
                  %s285 = sphi 0, %s289
                  %p286 = scmp.ge.s32.totalorder %s285, 1
                  %s290 = sphi %s239, %s239
                  %s291 = sphi %s236, %s236
                $region73: #{tpu_custom_call.1} parent=62 // loop_header_branch
                  %288 = sbr.rel (%p286) target = $region77
                $region74: #{tpu_custom_call.1} parent=62 // loop_body
                  %v292 = vld [vmem:[%s290] sm:%s283]
                  %293 = vst [vmem:[%s291] sm:%s283] %v292
                  %v294 = vld [vmem:[%s290 + $0x4] sm:%s283]
                  %295 = vst [vmem:[%s291 + $0x4] sm:%s283] %v294
                  %v296 = vld [vmem:[%s290 + $0x8] sm:%s283]
                  %297 = vst [vmem:[%s291 + $0x8] sm:%s283] %v296
                  %v298 = vld [vmem:[%s290 + $0xc] sm:%s283]
                  %299 = vst [vmem:[%s291 + $0xc] sm:%s283] %v298
                  %v300 = vld [vmem:[%s290 + $0x20] sm:%s283]
                  %301 = vst [vmem:[%s291 + $0x10] sm:%s283] %v300
                  %v302 = vld [vmem:[%s290 + $0x24] sm:%s283]
                  %303 = vst [vmem:[%s291 + $0x14] sm:%s283] %v302
                  %v304 = vld [vmem:[%s290 + $0x28] sm:%s283]
                  %305 = vst [vmem:[%s291 + $0x18] sm:%s283] %v304
                  %v306 = vld [vmem:[%s290 + $0x2c] sm:%s283]
                  %307 = vst [vmem:[%s291 + $0x1c] sm:%s283] %v306
                $region75: #{tpu_custom_call.1} parent=62 // loop_footer
                  %s289 = sadd.s32 1, %s285
                $region76: #{tpu_custom_call.1} parent=62 // loop_footer_branch
                  %284 = sbr.rel target = $region72
                $region77: #{tpu_custom_call.1} parent=62 // loop_exit
                  _
              $region63: #{tpu_custom_call.1} parent=47 // pred_fallthru
                _
            $region48: #{tpu_custom_call.1} parent=43 // pred_fallthru
              _
            // Predicated region
            $region49: #{tpu_custom_call.1} parent=43 // pred_check
              _
            $region50: #{tpu_custom_call.1} parent=43 // pred_check_branch
              %245 = sbr.rel (0) target = $region52
            $region51: #{tpu_custom_call.1} parent=43 // pred_region
              %s247 = ssub.s32 16, 1
              loop: start=0, step=1, limit=1
              $region53: #{tpu_custom_call.1} parent=51 // loop_pre_header
                _
              $region54: #{tpu_custom_call.1} parent=51 // loop_header
                %s249 = sphi 0, %s253
                %p250 = scmp.ge.s32.totalorder %s249, 1
                %s254 = sphi %s239, %s239
                %s255 = sphi %s236, %s236
              $region55: #{tpu_custom_call.1} parent=51 // loop_header_branch
                %252 = sbr.rel (%p250) target = $region59
              $region56: #{tpu_custom_call.1} parent=51 // loop_body
                %v256 = vld [vmem:[%s254] sm:%s247]
                %257 = vst [vmem:[%s255] sm:%s247] %v256
                %v258 = vld [vmem:[%s254 + $0x4] sm:%s247]
                %259 = vst [vmem:[%s255 + $0x4] sm:%s247] %v258
                %v260 = vld [vmem:[%s254 + $0x8] sm:%s247]
                %261 = vst [vmem:[%s255 + $0x8] sm:%s247] %v260
                %v262 = vld [vmem:[%s254 + $0xc] sm:%s247]
                %263 = vst [vmem:[%s255 + $0xc] sm:%s247] %v262
                %v264 = vld [vmem:[%s254 + $0x20] sm:%s247]
                %265 = vst [vmem:[%s255 + $0x10] sm:%s247] %v264
                %v266 = vld [vmem:[%s254 + $0x24] sm:%s247]
                %267 = vst [vmem:[%s255 + $0x14] sm:%s247] %v266
                %v268 = vld [vmem:[%s254 + $0x28] sm:%s247]
                %269 = vst [vmem:[%s255 + $0x18] sm:%s247] %v268
                %v270 = vld [vmem:[%s254 + $0x2c] sm:%s247]
                %271 = vst [vmem:[%s255 + $0x1c] sm:%s247] %v270
              $region57: #{tpu_custom_call.1} parent=51 // loop_footer
                %s253 = sadd.s32 1, %s249
              $region58: #{tpu_custom_call.1} parent=51 // loop_footer_branch
                %248 = sbr.rel target = $region54
              $region59: #{tpu_custom_call.1} parent=51 // loop_exit
                _
            $region52: #{tpu_custom_call.1} parent=43 // pred_fallthru
              _
          $region44: #{tpu_custom_call.1} parent=39 // pred_fallthru
            _
          %308 = vnop
        $region40: #{tpu_custom_call.1} parent=35 // pred_fallthru
          _
      $region36: #{tpu_custom_call.1} parent=5 // pred_fallthru
        _
      %p309 = scmp.le.s32.totalorder 1, %s17
      %p310 = scmp.lt.s32.totalorder %s17, 3
      %p311 = pnand %p309, %p310
      %p312 = pneg %p311
      // Predicated region
      $region78: #{tpu_custom_call.1} parent=5 // pred_check
        _
      $region79: #{tpu_custom_call.1} parent=5 // pred_check_branch
        %314 = sbr.rel (%p311) target = $region81
      $region80: #{tpu_custom_call.1} parent=5 // pred_region
        %s315 = ssub.s32 %s17, 1
        %s316 = sand.u32 %s30, 1
        %s317 = sand.u32 %s30, 1
        %s318 = smul.addr %s317, 32
        %s319 = scalar_lea.vmem [#allocation2], %s318
        // Predicated region
        $region82: #{tpu_custom_call.1} parent=80 // pred_check
          %p320 = pneg %p43
        $region83: #{tpu_custom_call.1} parent=80 // pred_check_branch
          %322 = sbr.rel (%p320) target = $region85
        $region84: #{tpu_custom_call.1} parent=80 // pred_region
          _
        $region85: #{tpu_custom_call.1} parent=80 // pred_fallthru
          _
        // Predicated region
        $region86: #{tpu_custom_call.1} parent=80 // pred_check
          %p323 = pneg %p106
        $region87: #{tpu_custom_call.1} parent=80 // pred_check_branch
          %325 = sbr.rel (%p323) target = $region89
        $region88: #{tpu_custom_call.1} parent=80 // pred_region
          %327 = dma.done [#allocation4], 2048
        $region89: #{tpu_custom_call.1} parent=80 // pred_fallthru
          _
        // Predicated region
        $region90: #{tpu_custom_call.1} parent=80 // pred_check
          %p328 = pneg %p127
        $region91: #{tpu_custom_call.1} parent=80 // pred_check_branch
          %330 = sbr.rel (%p328) target = $region93
        $region92: #{tpu_custom_call.1} parent=80 // pred_region
          %332 = dma.done [#allocation7], 1024
        $region93: #{tpu_custom_call.1} parent=80 // pred_fallthru
          _
        %s333 = sand.u32 %s30, 1
        %s334 = sand.u32 %s30, 1
        %s335 = smul.addr %s334, 32
        %s336 = scalar_lea.vmem [#allocation2], %s335
        %p337 = pneg %p43
        %p338 = pneg %p40
        %p339 = pneg %p64
        %p340 = pneg %p61
        %p341 = pneg %p85
        %p342 = pneg %p82
        %p343 = pneg %p106
        %p344 = pneg %p103
        %p345 = pneg %p127
        %p346 = pneg %p124
        %p347 = pneg %p148
        %p348 = pneg %p145
        %p349 = pneg %p174
        %p350 = pneg %p171
        %s351 = sand.u32 %s161, 1
        %s352 = scalar_lea.sflag [#allocation5], %s351
        %s353 = sand.u32 %s161, 1
        %s354 = smul.addr %s353, 32
        %s355 = scalar_lea.vmem [#allocation8], %s354
        %s356 = smul.u32 4, %s22
        %s357 = smul.u32 4, %s22
        %v359 = vld [vmem:[%s5] sm:$0xf]
        %v360 = vld [vmem:[%s319] sm:$0xf]
        %v361 = vld [vmem:[%s319 + $0x4] sm:$0xf]
        %v362 = vld [vmem:[%s319 + $0x8] sm:$0xf]
        %v363 = vld [vmem:[%s319 + $0xc] sm:$0xf]
        %v364 = vld [vmem:[%s319 + $0x10] sm:$0xf]
        %v365 = vld [vmem:[%s319 + $0x14] sm:$0xf]
        %v366 = vld [vmem:[%s319 + $0x18] sm:$0xf]
        %v367 = vld [vmem:[%s319 + $0x1c] sm:$0xf]
        %v368 = vld [vmem:[%s1] sm:$0xf]
        %v369 = vld [vmem:[%s1 + $0x4] sm:$0xf]
        %v370 = vld [vmem:[%s1 + $0x8] sm:$0xf]
        %v371 = vld [vmem:[%s1 + $0xc] sm:$0xf]
        %v372 = vperm.slane %v359, 0
        %v381 = vunpack.c.l.b16 %v360
        %v382 = vunpack.c.l.b16 %v361
        %v383 = vunpack.c.l.b16 %v362
        %v384 = vunpack.c.l.b16 %v363
        %v385 = vunpack.c.l.b16 %v364
        %v386 = vunpack.c.l.b16 %v365
        %v387 = vunpack.c.l.b16 %v366
        %v388 = vunpack.c.l.b16 %v367
        %v389 = vpack.c.b16 %v382, %v381
        %v390 = vpack.c.b16 %v384, %v383
        %v391 = vpack.c.b16 %v386, %v385
        %v392 = vpack.c.b16 %v388, %v387
        %v397 = vunpack.c.l.b16 %v368
        %v398 = vunpack.c.l.b16 %v369
        %v399 = vunpack.c.l.b16 %v370
        %v400 = vunpack.c.l.b16 %v371
        %v401 = vpack.c.b16 %v398, %v397
        %v402 = vpack.c.b16 %v400, %v399
        %vm405 = vcmask 261120
        %v407 = vsel %vm405, %v389, 0
        %v410 = vsel %vm405, %v390, 0
        %v413 = vsel %vm405, %v391, 0
        %v416 = vsel %vm405, %v392, 0
        %418 = vmatpush.bf16.msra.mxu0 0
        %419 = vmatpush.bf16.msra.mxu0 0
        %420 = vmatpush.bf16.msra.mxu0 0
        %421 = vmatpush.bf16.msra.mxu0 0
        %422 = vmatpush.bf16.msra.mxu0 0
        %423 = vmatpush.bf16.msra.mxu0 0
        %424 = vmatpush.bf16.msra.mxu0 %v402
        %425 = vmatpush.bf16.msra.mxu0 %v401
        %426 = vmatmul.bf16.gmra.mxu0 %v407
        %v427 = vpop.f32.mrf.mxu0
        %v428 = vadd.f32 %v372, %v427
        %v429 = vpop.f32.mrf.mxu0
        %v430 = vadd.f32 %v372, %v429
        %431 = vmatmul.bf16.gmra.mxu0 %v410
        %v432 = vpop.f32.mrf.mxu0
        %v433 = vadd.f32 %v372, %v432
        %v434 = vpop.f32.mrf.mxu0
        %v435 = vadd.f32 %v372, %v434
        %436 = vmatmul.bf16.gmra.mxu0 %v413
        %v437 = vpop.f32.mrf.mxu0
        %v438 = vadd.f32 %v372, %v437
        %v439 = vpop.f32.mrf.mxu0
        %v440 = vadd.f32 %v372, %v439
        %441 = vmatmul.bf16.gmra.mxu0 %v416
        %v442 = vpop.f32.mrf.mxu0
        %v443 = vadd.f32 %v372, %v442
        %v444 = vpop.f32.mrf.mxu0
        %v445 = vadd.f32 %v372, %v444
        %446 = vdwg.mxu0
        %v447 = vmax.f32 %v428, 0.0
        %v448 = vmax.f32 %v430, 0.0
        %v449 = vmax.f32 %v433, 0.0
        %v450 = vmax.f32 %v435, 0.0
        %v451 = vmax.f32 %v438, 0.0
        %v452 = vmax.f32 %v440, 0.0
        %v453 = vmax.f32 %v443, 0.0
        %v454 = vmax.f32 %v445, 0.0
        %v455 = vpack.c.bf16 %v448, %v447
        %v456 = vpack.c.bf16 %v450, %v449
        %v457 = vpack.c.bf16 %v452, %v451
        %v458 = vpack.c.bf16 %v454, %v453
        %v459 = vld [vmem:[%s2] sm:$0xf]
        %v460 = vld [vmem:[%s2 + $0x4] sm:$0xf]
        %v461 = vld [vmem:[%s2 + $0x8] sm:$0xf]
        %v462 = vld [vmem:[%s2 + $0xc] sm:$0xf]
        %v463 = vld [vmem:[%s2 + $0x10] sm:$0xf]
        %v464 = vld [vmem:[%s2 + $0x14] sm:$0xf]
        %v465 = vld [vmem:[%s2 + $0x18] sm:$0xf]
        %v466 = vld [vmem:[%s2 + $0x1c] sm:$0xf]
        %v467 = vld [vmem:[%s2 + $0x20] sm:$0xf]
        %v468 = vld [vmem:[%s2 + $0x24] sm:$0xf]
        %v469 = vld [vmem:[%s2 + $0x28] sm:$0xf]
        %v470 = vld [vmem:[%s2 + $0x2c] sm:$0xf]
        %v471 = vld [vmem:[%s2 + $0x30] sm:$0xf]
        %v472 = vld [vmem:[%s2 + $0x34] sm:$0xf]
        %v473 = vld [vmem:[%s2 + $0x38] sm:$0xf]
        %v474 = vld [vmem:[%s2 + $0x3c] sm:$0xf]
        %v475 = vperm.slane %v359, 1
        %v492 = vunpack.c.l.b16 %v459
        %v493 = vunpack.c.l.b16 %v460
        %v494 = vunpack.c.l.b16 %v461
        %v495 = vunpack.c.l.b16 %v462
        %v496 = vunpack.c.l.b16 %v463
        %v497 = vunpack.c.l.b16 %v464
        %v498 = vunpack.c.l.b16 %v465
        %v499 = vunpack.c.l.b16 %v466
        %v500 = vunpack.c.l.b16 %v467
        %v501 = vunpack.c.l.b16 %v468
        %v502 = vunpack.c.l.b16 %v469
        %v503 = vunpack.c.l.b16 %v470
        %v504 = vunpack.c.l.b16 %v471
        %v505 = vunpack.c.l.b16 %v472
        %v506 = vunpack.c.l.b16 %v473
        %v507 = vunpack.c.l.b16 %v474
        %v508 = vpack.c.b16 %v493, %v492
        %v509 = vpack.c.b16 %v495, %v494
        %v510 = vpack.c.b16 %v497, %v496
        %v511 = vpack.c.b16 %v499, %v498
        %v512 = vpack.c.b16 %v501, %v500
        %v513 = vpack.c.b16 %v503, %v502
        %v514 = vpack.c.b16 %v505, %v504
        %v515 = vpack.c.b16 %v507, %v506
        %524 = vmatpush.bf16.msra.mxu0 %v515
        %525 = vmatpush.bf16.msra.mxu0 %v514
        %526 = vmatpush.bf16.msra.mxu0 %v513
        %527 = vmatpush.bf16.msra.mxu0 %v512
        %528 = vmatpush.bf16.msra.mxu0 %v511
        %529 = vmatpush.bf16.msra.mxu0 %v510
        %530 = vmatpush.bf16.msra.mxu0 %v509
        %531 = vmatpush.bf16.msra.mxu0 %v508
        %532 = vmatmul.bf16.gmra.mxu0 %v455
        %v533 = vpop.f32.mrf.mxu0
        %v534 = vadd.f32 %v475, %v533
        %v535 = vpop.f32.mrf.mxu0
        %v536 = vadd.f32 %v475, %v535
        %537 = vmatmul.bf16.gmra.mxu0 %v456
        %v538 = vpop.f32.mrf.mxu0
        %v539 = vadd.f32 %v475, %v538
        %v540 = vpop.f32.mrf.mxu0
        %v541 = vadd.f32 %v475, %v540
        %542 = vmatmul.bf16.gmra.mxu0 %v457
        %v543 = vpop.f32.mrf.mxu0
        %v544 = vadd.f32 %v475, %v543
        %v545 = vpop.f32.mrf.mxu0
        %v546 = vadd.f32 %v475, %v545
        %547 = vmatmul.bf16.gmra.mxu0 %v458
        %v548 = vpop.f32.mrf.mxu0
        %v549 = vadd.f32 %v475, %v548
        %v550 = vpop.f32.mrf.mxu0
        %v551 = vadd.f32 %v475, %v550
        %552 = vdwg.mxu0
        %v553 = vpack.c.bf16 %v536, %v534
        %v554 = vpack.c.bf16 %v541, %v539
        %v555 = vpack.c.bf16 %v546, %v544
        %v556 = vpack.c.bf16 %v551, %v549
        %v557 = vld [vmem:[#allocation3] sm:$0xf]
        %v558 = vld [vmem:[#allocation3 + $0x4] sm:$0xf]
        %v559 = vld [vmem:[#allocation3 + $0x8] sm:$0xf]
        %v560 = vld [vmem:[#allocation3 + $0xc] sm:$0xf]
        %v561 = vld [vmem:[#allocation3 + $0x10] sm:$0xf]
        %v562 = vld [vmem:[#allocation3 + $0x14] sm:$0xf]
        %v563 = vld [vmem:[#allocation3 + $0x18] sm:$0xf]
        %v564 = vld [vmem:[#allocation3 + $0x1c] sm:$0xf]
        %v565 = vld [vmem:[#allocation3 + $0x20] sm:$0xf]
        %v566 = vld [vmem:[#allocation3 + $0x24] sm:$0xf]
        %v567 = vld [vmem:[#allocation3 + $0x28] sm:$0xf]
        %v568 = vld [vmem:[#allocation3 + $0x2c] sm:$0xf]
        %v569 = vld [vmem:[#allocation3 + $0x30] sm:$0xf]
        %v570 = vld [vmem:[#allocation3 + $0x34] sm:$0xf]
        %v571 = vld [vmem:[#allocation3 + $0x38] sm:$0xf]
        %v572 = vld [vmem:[#allocation3 + $0x3c] sm:$0xf]
        %s573 = scalar_lea.vmem [#allocation3], 64
        %v574 = vld [vmem:[%s573] sm:$0xf]
        %v575 = vld [vmem:[%s573 + $0x4] sm:$0xf]
        %v576 = vld [vmem:[%s573 + $0x8] sm:$0xf]
        %v577 = vld [vmem:[%s573 + $0xc] sm:$0xf]
        %v578 = vld [vmem:[%s573 + $0x10] sm:$0xf]
        %v579 = vld [vmem:[%s573 + $0x14] sm:$0xf]
        %v580 = vld [vmem:[%s573 + $0x18] sm:$0xf]
        %v581 = vld [vmem:[%s573 + $0x1c] sm:$0xf]
        %v582 = vld [vmem:[%s573 + $0x20] sm:$0xf]
        %v583 = vld [vmem:[%s573 + $0x24] sm:$0xf]
        %v584 = vld [vmem:[%s573 + $0x28] sm:$0xf]
        %v585 = vld [vmem:[%s573 + $0x2c] sm:$0xf]
        %v586 = vld [vmem:[%s573 + $0x30] sm:$0xf]
        %v587 = vld [vmem:[%s573 + $0x34] sm:$0xf]
        %v588 = vld [vmem:[%s573 + $0x38] sm:$0xf]
        %v589 = vld [vmem:[%s573 + $0x3c] sm:$0xf]
        %v606 = vunpack.c.l.b16 %v574
        %v607 = vunpack.c.l.b16 %v575
        %v608 = vunpack.c.l.b16 %v576
        %v609 = vunpack.c.l.b16 %v577
        %v610 = vunpack.c.l.b16 %v578
        %v611 = vunpack.c.l.b16 %v579
        %v612 = vunpack.c.l.b16 %v580
        %v613 = vunpack.c.l.b16 %v581
        %v614 = vunpack.c.l.b16 %v582
        %v615 = vunpack.c.l.b16 %v583
        %v616 = vunpack.c.l.b16 %v584
        %v617 = vunpack.c.l.b16 %v585
        %v618 = vunpack.c.l.b16 %v586
        %v619 = vunpack.c.l.b16 %v587
        %v620 = vunpack.c.l.b16 %v588
        %v621 = vunpack.c.l.b16 %v589
        %v622 = vpack.c.b16 %v607, %v606
        %v623 = vpack.c.b16 %v609, %v608
        %v624 = vpack.c.b16 %v611, %v610
        %v625 = vpack.c.b16 %v613, %v612
        %v626 = vpack.c.b16 %v615, %v614
        %v627 = vpack.c.b16 %v617, %v616
        %v628 = vpack.c.b16 %v619, %v618
        %v629 = vpack.c.b16 %v621, %v620
        %638 = vmatpush.bf16.msra.mxu0 %v629
        %639 = vmatpush.bf16.msra.mxu0 %v628
        %640 = vmatpush.bf16.msra.mxu0 %v627
        %641 = vmatpush.bf16.msra.mxu0 %v626
        %642 = vmatpush.bf16.msra.mxu0 %v625
        %643 = vmatpush.bf16.msra.mxu0 %v624
        %644 = vmatpush.bf16.msra.mxu0 %v623
        %645 = vmatpush.bf16.msra.mxu0 %v622
        %646 = vmatmul.bf16.gmra.mxu0 %v555
        %v647 = vpop.f32.mrf.mxu0
        %v648 = vadd.f32 0.0, %v647
        %v649 = vpop.f32.mrf.mxu0
        %v650 = vadd.f32 0.0, %v649
        %651 = vmatmul.bf16.gmra.mxu0 %v556
        %v652 = vpop.f32.mrf.mxu0
        %v653 = vadd.f32 0.0, %v652
        %v654 = vpop.f32.mrf.mxu0
        %v655 = vadd.f32 0.0, %v654
        %656 = vdwg.mxu0
        %v673 = vunpack.c.l.b16 %v557
        %v674 = vunpack.c.l.b16 %v558
        %v675 = vunpack.c.l.b16 %v559
        %v676 = vunpack.c.l.b16 %v560
        %v677 = vunpack.c.l.b16 %v561
        %v678 = vunpack.c.l.b16 %v562
        %v679 = vunpack.c.l.b16 %v563
        %v680 = vunpack.c.l.b16 %v564
        %v681 = vunpack.c.l.b16 %v565
        %v682 = vunpack.c.l.b16 %v566
        %v683 = vunpack.c.l.b16 %v567
        %v684 = vunpack.c.l.b16 %v568
        %v685 = vunpack.c.l.b16 %v569
        %v686 = vunpack.c.l.b16 %v570
        %v687 = vunpack.c.l.b16 %v571
        %v688 = vunpack.c.l.b16 %v572
        %v689 = vpack.c.b16 %v674, %v673
        %v690 = vpack.c.b16 %v676, %v675
        %v691 = vpack.c.b16 %v678, %v677
        %v692 = vpack.c.b16 %v680, %v679
        %v693 = vpack.c.b16 %v682, %v681
        %v694 = vpack.c.b16 %v684, %v683
        %v695 = vpack.c.b16 %v686, %v685
        %v696 = vpack.c.b16 %v688, %v687
        %705 = vmatpush.bf16.msra.mxu0 %v696
        %706 = vmatpush.bf16.msra.mxu0 %v695
        %707 = vmatpush.bf16.msra.mxu0 %v694
        %708 = vmatpush.bf16.msra.mxu0 %v693
        %709 = vmatpush.bf16.msra.mxu0 %v692
        %710 = vmatpush.bf16.msra.mxu0 %v691
        %711 = vmatpush.bf16.msra.mxu0 %v690
        %712 = vmatpush.bf16.msra.mxu0 %v689
        %713 = vmatmul.bf16.gmra.mxu0 %v553
        %v714 = vpop.f32.mrf.mxu0
        %v715 = vadd.f32 %v648, %v714
        %v716 = vpop.f32.mrf.mxu0
        %v717 = vadd.f32 %v650, %v716
        %718 = vmatmul.bf16.gmra.mxu0 %v554
        %v719 = vpop.f32.mrf.mxu0
        %v720 = vadd.f32 %v653, %v719
        %v721 = vpop.f32.mrf.mxu0
        %v722 = vadd.f32 %v655, %v721
        %723 = vdwg.mxu0
        %v724 = vperm.slane %v359, 2
        %v725 = vadd.f32 %v715, %v724
        %v726 = vadd.f32 %v717, %v724
        %v727 = vadd.f32 %v720, %v724
        %v728 = vadd.f32 %v722, %v724
        %v729 = vmax.f32 %v725, 0.0
        %v730 = vmax.f32 %v726, 0.0
        %v731 = vmax.f32 %v727, 0.0
        %v732 = vmax.f32 %v728, 0.0
        %v733 = vpack.c.bf16 %v730, %v729
        %v734 = vpack.c.bf16 %v732, %v731
        %v735 = vld [vmem:[#allocation6] sm:$0xf]
        %v736 = vld [vmem:[#allocation6 + $0x4] sm:$0xf]
        %v737 = vld [vmem:[#allocation6 + $0x8] sm:$0xf]
        %v738 = vld [vmem:[#allocation6 + $0xc] sm:$0xf]
        %v739 = vld [vmem:[#allocation6 + $0x10] sm:$0xf]
        %v740 = vld [vmem:[#allocation6 + $0x14] sm:$0xf]
        %v741 = vld [vmem:[#allocation6 + $0x18] sm:$0xf]
        %v742 = vld [vmem:[#allocation6 + $0x1c] sm:$0xf]
        %v743 = vld [vmem:[#allocation6 + $0x20] sm:$0xf]
        %v744 = vld [vmem:[#allocation6 + $0x24] sm:$0xf]
        %v745 = vld [vmem:[#allocation6 + $0x28] sm:$0xf]
        %v746 = vld [vmem:[#allocation6 + $0x2c] sm:$0xf]
        %v747 = vld [vmem:[#allocation6 + $0x30] sm:$0xf]
        %v748 = vld [vmem:[#allocation6 + $0x34] sm:$0xf]
        %v749 = vld [vmem:[#allocation6 + $0x38] sm:$0xf]
        %v750 = vld [vmem:[#allocation6 + $0x3c] sm:$0xf]
        %v751 = vperm.slane %v359, 3
        %v768 = vunpack.c.l.b16 %v735
        %v769 = vunpack.c.l.b16 %v736
        %v770 = vunpack.c.l.b16 %v737
        %v771 = vunpack.c.l.b16 %v738
        %v772 = vunpack.c.l.b16 %v739
        %v773 = vunpack.c.l.b16 %v740
        %v774 = vunpack.c.l.b16 %v741
        %v775 = vunpack.c.l.b16 %v742
        %v776 = vunpack.c.l.b16 %v743
        %v777 = vunpack.c.l.b16 %v744
        %v778 = vunpack.c.l.b16 %v745
        %v779 = vunpack.c.l.b16 %v746
        %v780 = vunpack.c.l.b16 %v747
        %v781 = vunpack.c.l.b16 %v748
        %v782 = vunpack.c.l.b16 %v749
        %v783 = vunpack.c.l.b16 %v750
        %v784 = vpack.c.b16 %v769, %v768
        %v785 = vpack.c.b16 %v771, %v770
        %v786 = vpack.c.b16 %v773, %v772
        %v787 = vpack.c.b16 %v775, %v774
        %v788 = vpack.c.b16 %v777, %v776
        %v789 = vpack.c.b16 %v779, %v778
        %v790 = vpack.c.b16 %v781, %v780
        %v791 = vpack.c.b16 %v783, %v782
        %800 = vmatpush.bf16.msra.mxu0 %v791
        %801 = vmatpush.bf16.msra.mxu0 %v790
        %802 = vmatpush.bf16.msra.mxu0 %v789
        %803 = vmatpush.bf16.msra.mxu0 %v788
        %804 = vmatpush.bf16.msra.mxu0 %v787
        %805 = vmatpush.bf16.msra.mxu0 %v786
        %806 = vmatpush.bf16.msra.mxu0 %v785
        %807 = vmatpush.bf16.msra.mxu0 %v784
        %808 = vmatmul.bf16.gmra.mxu0 %v733
        %v809 = vpop.f32.mrf.mxu0
        %v810 = vadd.f32 %v751, %v809
        %v811 = vpop.f32.mrf.mxu0
        %v812 = vadd.f32 %v751, %v811
        %813 = vmatmul.bf16.gmra.mxu0 %v734
        %v814 = vpop.f32.mrf.mxu0
        %v815 = vadd.f32 %v751, %v814
        %v816 = vpop.f32.mrf.mxu0
        %v817 = vadd.f32 %v751, %v816
        %818 = vdwg.mxu0
        %819 = vmax.xlane.f32.xlu0 %v810
        %v820 = vpop.xlane.xlu0 %819
        %821 = vmax.xlane.f32.xlu0 %v812
        %v822 = vpop.xlane.xlu0 %821
        %823 = vmax.xlane.f32.xlu0 %v815
        %v824 = vpop.xlane.xlu0 %823
        %825 = vmax.xlane.f32.xlu0 %v817
        %v826 = vpop.xlane.xlu0 %825
        %v827 = vsub.f32 %v810, %v820
        %v828 = vsub.f32 %v812, %v822
        %v829 = vsub.f32 %v815, %v824
        %v830 = vsub.f32 %v817, %v826
        %v831 = vmul.f32 %v827, 1.442695
        %v832 = vpow.pop %v831
        %v833 = vmul.f32 %v828, 1.442695
        %v834 = vpow.pop %v833
        %v835 = vmul.f32 %v829, 1.442695
        %v836 = vpow.pop %v835
        %v837 = vmul.f32 %v830, 1.442695
        %v838 = vpow.pop %v837
        %839 = vadd.xlane.f32.xlu0 %v832
        %v840 = vpop.xlane.xlu0 %839
        %841 = vadd.xlane.f32.xlu0 %v834
        %v842 = vpop.xlane.xlu0 %841
        %843 = vadd.xlane.f32.xlu0 %v836
        %v844 = vpop.xlane.xlu0 %843
        %845 = vadd.xlane.f32.xlu0 %v838
        %v846 = vpop.xlane.xlu0 %845
        %v847 = vrcp.pop %v840
        %v848 = vmul.f32 %v840, %v847
        %v849 = vsub.f32 1.0, %v848
        %v850 = vmul.f32 %v847, %v849
        %v851 = vadd.f32 %v847, %v850
        %vm852 = vweird.f32 %v840
        %vm853 = vweird.f32 %v847
        %vm854 = vmor %vm852, %vm853
        %v855 = vsel %vm854, %v847, %v851
        %v856 = vand.u32 2147483647, %v840
        %vm857 = vcmp.eq.f32.partialorder %v856, 8.507059e+37
        %v858 = vand.u32 %v840, 2147483648
        %v859 = vor.u32 1.1754944e-38, %v858
        %v860 = vsel %vm857, %v859, %v855
        %v861 = vmul.f32 %v832, %v860
        %v862 = vrcp.pop %v842
        %v863 = vmul.f32 %v842, %v862
        %v864 = vsub.f32 1.0, %v863
        %v865 = vmul.f32 %v862, %v864
        %v866 = vadd.f32 %v862, %v865
        %vm867 = vweird.f32 %v842
        %vm868 = vweird.f32 %v862
        %vm869 = vmor %vm867, %vm868
        %v870 = vsel %vm869, %v862, %v866
        %v871 = vand.u32 2147483647, %v842
        %vm872 = vcmp.eq.f32.partialorder %v871, 8.507059e+37
        %v873 = vand.u32 %v842, 2147483648
        %v874 = vor.u32 1.1754944e-38, %v873
        %v875 = vsel %vm872, %v874, %v870
        %v876 = vmul.f32 %v834, %v875
        %v877 = vrcp.pop %v844
        %v878 = vmul.f32 %v844, %v877
        %v879 = vsub.f32 1.0, %v878
        %v880 = vmul.f32 %v877, %v879
        %v881 = vadd.f32 %v877, %v880
        %vm882 = vweird.f32 %v844
        %vm883 = vweird.f32 %v877
        %vm884 = vmor %vm882, %vm883
        %v885 = vsel %vm884, %v877, %v881
        %v886 = vand.u32 2147483647, %v844
        %vm887 = vcmp.eq.f32.partialorder %v886, 8.507059e+37
        %v888 = vand.u32 %v844, 2147483648
        %v889 = vor.u32 1.1754944e-38, %v888
        %v890 = vsel %vm887, %v889, %v885
        %v891 = vmul.f32 %v836, %v890
        %v892 = vrcp.pop %v846
        %v893 = vmul.f32 %v846, %v892
        %v894 = vsub.f32 1.0, %v893
        %v895 = vmul.f32 %v892, %v894
        %v896 = vadd.f32 %v892, %v895
        %vm897 = vweird.f32 %v846
        %vm898 = vweird.f32 %v892
        %vm899 = vmor %vm897, %vm898
        %v900 = vsel %vm899, %v892, %v896
        %v901 = vand.u32 2147483647, %v846
        %vm902 = vcmp.eq.f32.partialorder %v901, 8.507059e+37
        %v903 = vand.u32 %v846, 2147483648
        %v904 = vor.u32 1.1754944e-38, %v903
        %v905 = vsel %vm902, %v904, %v900
        %v906 = vmul.f32 %v838, %v905
        %907 = vst [vmem:[%s355] sm:$0xff] %v861
        %908 = vst [vmem:[%s355 + $0x8] sm:$0xff] %v876
        %909 = vst [vmem:[%s355 + $0x10] sm:$0xff] %v891
        %910 = vst [vmem:[%s355 + $0x18] sm:$0xff] %v906
        %s911 = sand.u32 %s161, 1
        %s912 = scalar_lea.sflag [#allocation5], %s911
        %s913 = sand.u32 %s161, 1
        %s914 = smul.addr %s913, 32
        %s915 = scalar_lea.vmem [#allocation8], %s914
        // Predicated region
        $region94: #{tpu_custom_call.1} parent=80 // pred_check
          %p916 = pneg %p171
        $region95: #{tpu_custom_call.1} parent=80 // pred_check_branch
          %918 = sbr.rel (%p916) target = $region97
        $region96: #{tpu_custom_call.1} parent=80 // pred_region
          %s919 = smul.u32 4, %s22
          %921 = vsyncadd %s912, 0
          %s922 = smul.addr %s919, 8
          %s923 = scalar_lea.hbm %s6, %s922
          %s924 = sshll.u32 %s915, 4
          %s925 = int_to_ptr.vmem [resolvable:$true] %s924
          %s926 = sshll.u32 %s923, 4
          %s927 = int_to_ptr.hbm [resolvable:$true] %s926
          %932 = dma.vmem_to_hbm [thread:$0]  %s925, 512, %s927, %s912, 128, 128, 8
        $region97: #{tpu_custom_call.1} parent=80 // pred_fallthru
          _
      $region81: #{tpu_custom_call.1} parent=5 // pred_fallthru
        _
      %p933 = scmp.le.s32.totalorder 2, %s17
      // Predicated region
      $region98: #{tpu_custom_call.1} parent=5 // pred_check
        %p934 = pneg %p933
      $region99: #{tpu_custom_call.1} parent=5 // pred_check_branch
        %936 = sbr.rel (%p934) target = $region101
      $region100: #{tpu_custom_call.1} parent=5 // pred_region
        %s937 = ssub.s32 %s17, 2
        // Predicated region
        $region102: #{tpu_custom_call.1} parent=100 // pred_check
          %p938 = pneg %p177
        $region103: #{tpu_custom_call.1} parent=100 // pred_check_branch
          %940 = sbr.rel (%p938) target = $region105
        $region104: #{tpu_custom_call.1} parent=100 // pred_region
          %s941 = sand.u32 %s162, 1
          %s942 = scalar_lea.sflag [#allocation5], %s941
          %s943 = sand.u32 %s162, 1
          %s944 = smul.addr %s943, 32
          %s945 = scalar_lea.vmem [#allocation8], %s944
          %947 = dma.done %s942, 512
        $region105: #{tpu_custom_call.1} parent=100 // pred_fallthru
          _
      $region101: #{tpu_custom_call.1} parent=5 // pred_fallthru
        _
    $region6: #{tpu_custom_call.1} parent=1 // loop_footer
      %s21 = sadd.s32 1, %s17
    $region7: #{tpu_custom_call.1} parent=1 // loop_footer_branch
      %16 = sbr.rel target = $region3
    $region8: #{tpu_custom_call.1} parent=1 // loop_exit
      _
    %948 = vsyncpa [#allocation4], 1
    %s949 = scalar_lea.sflag [#allocation4], 1
    %950 = vsyncpa %s949, 1
    %951 = vsyncpa [#allocation7], 1
    %952 = vsyncpa [#allocation5], 1
    %s953 = scalar_lea.sflag [#allocation5], 1
    %954 = vsyncpa %s953, 1

</llo_original>
